<compile_context>
chip_gen: v7x
topology: tpu7x:2x2x1
jax: 0.10.0
libtpu: 0.0.40
codegen_flags: <defaults>
</compile_context>

<pallas_src>
import jax
import jax.numpy as jnp
import numpy as np
from jax import lax
from jax.experimental import pallas as pl
from jax.experimental.pallas import tpu as pltpu


# ---------------------------------------------------------------------------
# Fused kernel: pools + fc1 + relu + fc2 + sigmoid + add, Bt images per step
# ---------------------------------------------------------------------------
def _ca_fuse_kernel(high_ref, low_ref, w1_ref, b1_ref, w2_ref, b2_ref, o_ref):
    # high_ref: (Bt, C, Sh), low_ref: (Bt, C, Sl)  -- spatial on the lane axis
    # o_ref:    (Bt, C)                            -- lane-dense output block
    bt = o_ref.shape[0]

    avg = jnp.mean(high_ref[...], axis=2)          # (Bt, C)  adaptive_avg_pool2d(high)
    mx = jnp.max(low_ref[...], axis=2)             # (Bt, C)  adaptive_max_pool2d(low)

    # Stack both branches on the sublane axis -> run the MLP chain once.
    p = jnp.concatenate([avg, mx], axis=0)         # (2*Bt, C)

    # fc1 (1x1 conv), weights in native PyTorch (Cr, C) layout: contract C.
    h = lax.dot_general(p, w1_ref[...], (((1,), (1,)), ((), ())),
                        preferred_element_type=jnp.float32) + b1_ref[...]   # (2*Bt, Cr)
    h = jnp.maximum(h, 0.0)                        # ReLU

    # fc2 (1x1 conv), weights in native (C, Cr) layout: contract Cr.
    s = lax.dot_general(h, w2_ref[...], (((1,), (1,)), ((), ())),
                        preferred_element_type=jnp.float32) + b2_ref[...]   # (2*Bt, C)
    s = jax.nn.sigmoid(s)

    # x1 + x2: add the avg-branch rows to the max-branch rows.
    o_ref[...] = s[:bt, :] + s[bt:, :]


def _choose_block_batch(B, C, s_high, s_low,
                        target_bytes=1 << 20, vmem_budget=10 << 20):
    """Pick how many images to process per grid step."""
    per_image = C * (s_high + s_low) * 4           # f32 bytes per image (both inputs)
    bt = max(1, target_bytes // max(per_image, 1))
    # keep 2 inputs x 2 pipeline buffers comfortably under default scoped VMEM
    # on all generations (v5e: 16 MiB, v6e/v7x: 32 MiB).
    bt = min(bt, max(1, vmem_budget // (2 * per_image)))
    # keep at least 2 grid steps so both v7x TensorCores get work.
    bt = min(bt, max(1, (B + 1) // 2))
    bt = min(bt, B)
    # output block is (bt, C): its sublane dim must be a multiple of 8
    # or equal the full batch.
    if bt < B:
        bt = (bt // 8) * 8
        if bt == 0:
            bt = B                                 # batch too small to tile
    return bt


def channel_attention_fuse(low, high, fc1_w, fc1_b, fc2_w, fc2_b):
    """low, high: NCHW float32. Returns (B, C, 1, 1), matching the PyTorch module."""
    B, C, Hh, Wh = high.shape
    Bl, Cl, Hl, Wl = low.shape
    assert Bl == B and Cl == C
    Cr = fc1_w.shape[0]
    Sh, Sl = Hh * Wh, Hl * Wl

    # Free views of contiguous NCHW (no transpose / HBM copy).
    high_f = high.reshape(B, C, Sh)
    low_f = low.reshape(B, C, Sl)
    b1 = fc1_b.reshape(1, Cr)
    b2 = fc2_b.reshape(1, C)

    bt = _choose_block_batch(B, C, Sh, Sl)
    grid = (pl.cdiv(B, bt),)

    cost = pl.CostEstimate(
        flops=int(B * C * (Sh + Sl) + 8 * B * C * Cr + 4 * B * C),
        transcendentals=int(2 * B * C),
        bytes_accessed=int(4 * (B * C * (Sh + Sl) + B * C + 2 * C * Cr + C + Cr)),
    )

    out = pl.pallas_call(
        _ca_fuse_kernel,
        out_shape=jax.ShapeDtypeStruct((B, C), jnp.float32),
        grid=grid,
        in_specs=[
            pl.BlockSpec((bt, C, Sh), lambda b: (b, 0, 0)),
            pl.BlockSpec((bt, C, Sl), lambda b: (b, 0, 0)),
            pl.BlockSpec((Cr, C), lambda b: (0, 0)),
            pl.BlockSpec((1, Cr), lambda b: (0, 0)),
            pl.BlockSpec((C, Cr), lambda b: (0, 0)),
            pl.BlockSpec((1, C), lambda b: (0, 0)),
        ],
        out_specs=pl.BlockSpec((bt, C), lambda b: (b, 0)),
        compiler_params=pltpu.CompilerParams(dimension_semantics=("parallel",)),
        cost_estimate=cost,
    )(high_f, low_f, fc1_w, b1, fc2_w, b2)

    return out.reshape(B, C, 1, 1)


# ---------------------------------------------------------------------------
# Pure-JAX reference (PyTorch semantics) for validation
# ---------------------------------------------------------------------------
def reference_forward(low, high, fc1_w, fc1_b, fc2_w, fc2_b):
    x1 = jnp.mean(high, axis=(2, 3))               # (B, C): adaptive_avg_pool2d(high)
    x2 = jnp.max(low, axis=(2, 3))                 # (B, C): adaptive_max_pool2d(low)

    def mlp(v):
        h = jnp.maximum(v @ fc1_w.T + fc1_b, 0.0)
        return jax.nn.sigmoid(h @ fc2_w.T + fc2_b)

    x = mlp(x1) + mlp(x2)
    B, C = x.shape
    return x.reshape(B, C, 1, 1)


# ---------------------------------------------------------------------------
# Deterministic example
# ---------------------------------------------------------------------------
if __name__ == "__main__":
    B, C = 16, 16                # batch, input_channels
    Cr = C // 4                  # internal_neurons = 4
    Hh = Wh = 8                  # `high` spatial
    Hl = Wl = 16                 # `low` spatial

    key = jax.random.PRNGKey(0)
    k_high, k_low, k1, k2, k3, k4 = jax.random.split(key, 6)

    high = jax.random.normal(k_high, (B, C, Hh, Wh), dtype=jnp.float32)
    low = jax.random.normal(k_low, (B, C, Hl, Wl), dtype=jnp.float32)

    # 1x1-conv weights in native PyTorch (out_ch, in_ch) layout; 1-D biases.
    fc1_w = 0.2 * jax.random.normal(k1, (Cr, C), dtype=jnp.float32)
    fc1_b = 0.2 * jax.random.normal(k2, (Cr,), dtype=jnp.float32)
    fc2_w = 0.2 * jax.random.normal(k3, (C, Cr), dtype=jnp.float32)
    fc2_b = 0.2 * jax.random.normal(k4, (C,), dtype=jnp.float32)

    out = jax.block_until_ready(
        channel_attention_fuse(low, high, fc1_w, fc1_b, fc2_w, fc2_b))
    assert out.shape == (B, C, 1, 1)

    ref = jax.block_until_ready(
        reference_forward(low, high, fc1_w, fc1_b, fc2_w, fc2_b))

    if not np.allclose(np.asarray(out), np.asarray(ref), atol=1e-2, rtol=1e-2):
        raise SystemExit("mismatch vs reference, max abs err = %g"
                         % float(np.max(np.abs(np.asarray(out) - np.asarray(ref)))))
    print("KERNEL_OK")
</pallas_src>

<mosaic_0001>
module attributes {stable_mosaic.version = 11 : i64} {
  func.func @_ca_fuse_kernel(%arg0: i32, %arg1: memref<8x16x64xf32, #tpu.memory_space<vmem>>, %arg2: memref<8x16x256xf32, #tpu.memory_space<vmem>>, %arg3: memref<4x16xf32, #tpu.memory_space<vmem>>, %arg4: memref<1x4xf32, #tpu.memory_space<vmem>>, %arg5: memref<16x4xf32, #tpu.memory_space<vmem>>, %arg6: memref<1x16xf32, #tpu.memory_space<vmem>>, %arg7: memref<8x16xf32, #tpu.memory_space<vmem>>) attributes {dimension_semantics = [#tpu.dimension_semantics<parallel>], iteration_bounds = array<i64: 2>, scalar_prefetch = 0 : i64, scratch_operands = 0 : i64, tpu.core_type = #tpu.core_type<tc>, window_params = [{transform_indices = @transform_0, window_bounds = array<i64: 8, 16, 64>}, {transform_indices = @transform_1, window_bounds = array<i64: 8, 16, 256>}, {pipeline_mode = #tpu.pipeline_mode<synchronous>, transform_indices = @transform_2, window_bounds = array<i64: 4, 16>}, {pipeline_mode = #tpu.pipeline_mode<synchronous>, transform_indices = @transform_3, window_bounds = array<i64: 1, 4>}, {pipeline_mode = #tpu.pipeline_mode<synchronous>, transform_indices = @transform_4, window_bounds = array<i64: 16, 4>}, {pipeline_mode = #tpu.pipeline_mode<synchronous>, transform_indices = @transform_5, window_bounds = array<i64: 1, 16>}, {transform_indices = @transform_6, window_bounds = array<i64: 8, 16>}]} {
    %c0 = arith.constant 0 : index
    %c0_0 = arith.constant 0 : index
    %c0_1 = arith.constant 0 : index
    %0 = vector.load %arg1[%c0, %c0_0, %c0_1] : memref<8x16x64xf32, #tpu.memory_space<vmem>>, vector<8x16x64xf32>
    %cst = arith.constant dense<0.000000e+00> : vector<8x16xf32>
    %1 = vector.multi_reduction <add>, %0, %cst [2] : vector<8x16x64xf32> to vector<8x16xf32>
    %cst_2 = arith.constant 6.400000e+01 : f32
    %2 = vector.broadcast %cst_2 : f32 to vector<8x16xf32>
    %3 = arith.divf %1, %2 : vector<8x16xf32>
    %c0_3 = arith.constant 0 : index
    %c0_4 = arith.constant 0 : index
    %c0_5 = arith.constant 0 : index
    %4 = vector.load %arg2[%c0_3, %c0_4, %c0_5] : memref<8x16x256xf32, #tpu.memory_space<vmem>>, vector<8x16x256xf32>
    %cst_6 = arith.constant dense<0xFF800000> : vector<8x16xf32>
    %5 = vector.multi_reduction <maximumf>, %4, %cst_6 [2] : vector<8x16x256xf32> to vector<8x16xf32>
    %6 = tpu.concatenate %3, %5 in 0 : vector<8x16xf32>, vector<8x16xf32> -> vector<16x16xf32>
    %c0_7 = arith.constant 0 : index
    %c0_8 = arith.constant 0 : index
    %7 = vector.load %arg3[%c0_7, %c0_8] : memref<4x16xf32, #tpu.memory_space<vmem>>, vector<4x16xf32>
    %cst_9 = arith.constant dense<0.000000e+00> : vector<16x4xf32>
    %8 = tpu.matmul %6, %7, %cst_9 {dimension_numbers = #tpu.dot_dimension_numbers<[1], [1], [0], [0], [0, 0, 1, 0], [], []>} : vector<16x16xf32>, vector<4x16xf32>, vector<16x4xf32> -> vector<16x4xf32>
    %c0_10 = arith.constant 0 : index
    %c0_11 = arith.constant 0 : index
    %9 = vector.load %arg4[%c0_10, %c0_11] : memref<1x4xf32, #tpu.memory_space<vmem>>, vector<1x4xf32>
    %10 = vector.broadcast %9 : vector<1x4xf32> to vector<16x4xf32>
    %11 = arith.addf %8, %10 : vector<16x4xf32>
    %cst_12 = arith.constant 0.000000e+00 : f32
    %12 = vector.broadcast %cst_12 : f32 to vector<16x4xf32>
    %13 = arith.maximumf %11, %12 : vector<16x4xf32>
    %c0_13 = arith.constant 0 : index
    %c0_14 = arith.constant 0 : index
    %14 = vector.load %arg5[%c0_13, %c0_14] : memref<16x4xf32, #tpu.memory_space<vmem>>, vector<16x4xf32>
    %cst_15 = arith.constant dense<0.000000e+00> : vector<16x16xf32>
    %15 = tpu.matmul %13, %14, %cst_15 {dimension_numbers = #tpu.dot_dimension_numbers<[1], [1], [0], [0], [0, 0, 1, 0], [], []>} : vector<16x4xf32>, vector<16x4xf32>, vector<16x16xf32> -> vector<16x16xf32>
    %c0_16 = arith.constant 0 : index
    %c0_17 = arith.constant 0 : index
    %16 = vector.load %arg6[%c0_16, %c0_17] : memref<1x16xf32, #tpu.memory_space<vmem>>, vector<1x16xf32>
    %17 = vector.broadcast %16 : vector<1x16xf32> to vector<16x16xf32>
    %18 = arith.addf %15, %17 : vector<16x16xf32>
    %19 = arith.negf %18 : vector<16x16xf32>
    %20 = math.exp %19 : vector<16x16xf32>
    %cst_18 = arith.constant 1.000000e+00 : f32
    %21 = vector.broadcast %cst_18 : f32 to vector<16x16xf32>
    %22 = arith.addf %21, %20 : vector<16x16xf32>
    %23 = arith.divf %21, %22 : vector<16x16xf32>
    %24 = vector.extract_strided_slice %23 {offsets = [0, 0], sizes = [8, 16], strides = [1, 1]} : vector<16x16xf32> to vector<8x16xf32>
    %25 = vector.extract_strided_slice %23 {offsets = [8, 0], sizes = [8, 16], strides = [1, 1]} : vector<16x16xf32> to vector<8x16xf32>
    %26 = arith.addf %24, %25 : vector<8x16xf32>
    %c0_19 = arith.constant 0 : index
    %c0_20 = arith.constant 0 : index
    %27 = vector.load %arg7[%c0_19, %c0_20] : memref<8x16xf32, #tpu.memory_space<vmem>>, vector<8x16xf32>
    tpu.vector_store %arg7[%c0_19, %c0_20], %26 {strides = array<i32>} : memref<8x16xf32, #tpu.memory_space<vmem>>, vector<8x16xf32>,
    return
  }
  func.func @transform_0(%arg0: i32) -> (i32, i32, i32) {
    %c0_i32 = arith.constant 0 : i32
    %c0_i32_0 = arith.constant 0 : i32
    %c0_i32_1 = arith.constant 0 : i32
    return %arg0, %c0_i32, %c0_i32_0 : i32, i32, i32
  }
  func.func @transform_1(%arg0: i32) -> (i32, i32, i32) {
    %c0_i32 = arith.constant 0 : i32
    %c0_i32_0 = arith.constant 0 : i32
    %c0_i32_1 = arith.constant 0 : i32
    return %arg0, %c0_i32, %c0_i32_0 : i32, i32, i32
  }
  func.func @transform_2(%arg0: i32) -> (i32, i32) {
    %c0_i32 = arith.constant 0 : i32
    %c0_i32_0 = arith.constant 0 : i32
    %c0_i32_1 = arith.constant 0 : i32
    return %c0_i32, %c0_i32_0 : i32, i32
  }
  func.func @transform_3(%arg0: i32) -> (i32, i32) {
    %c0_i32 = arith.constant 0 : i32
    %c0_i32_0 = arith.constant 0 : i32
    %c0_i32_1 = arith.constant 0 : i32
    return %c0_i32, %c0_i32_0 : i32, i32
  }
  func.func @transform_4(%arg0: i32) -> (i32, i32) {
    %c0_i32 = arith.constant 0 : i32
    %c0_i32_0 = arith.constant 0 : i32
    %c0_i32_1 = arith.constant 0 : i32
    return %c0_i32, %c0_i32_0 : i32, i32
  }
  func.func @transform_5(%arg0: i32) -> (i32, i32) {
    %c0_i32 = arith.constant 0 : i32
    %c0_i32_0 = arith.constant 0 : i32
    %c0_i32_1 = arith.constant 0 : i32
    return %c0_i32, %c0_i32_0 : i32, i32
  }
  func.func @transform_6(%arg0: i32) -> (i32, i32) {
    %c0_i32 = arith.constant 0 : i32
    %c0_i32_0 = arith.constant 0 : i32
    return %arg0, %c0_i32 : i32, i32
  }
}

</mosaic_0001>

<llo_original>
// kernel: tpu_custom_call.1
$region0: #{tpu_custom_call.1}
  #allocation0 [shape = 'u32[]', space=smem, size = 0x4, offset = 0x4, fixed_abs, tag = 'smem constant byte address 0x4 - core index']
  #allocation1 [shape = 'u32[144,128]{1,0:T(1,128)}', space=vmem, size = 0x12000, scoped, tag = 'internal scratch']
  %s0 = inlined_call_operand.hbm [shape: f32[16,16,64], index: 0, kind: input, shape index: {}]
  %s1 = inlined_call_operand.hbm [shape: f32[16,16,256], index: 1, kind: input, shape index: {}]
  %s2 = inlined_call_operand.vmem [shape: f32[4,16], index: 2, kind: input, shape index: {}]
  %s3 = inlined_call_operand.vmem [shape: f32[1,4], index: 3, kind: input, shape index: {}]
  %s4 = inlined_call_operand.vmem [shape: f32[16,4], index: 4, kind: input, shape index: {}]
  %s5 = inlined_call_operand.vmem [shape: f32[1,16], index: 5, kind: input, shape index: {}]
  %s6 = inlined_call_operand.hbm [shape: f32[16,16], index: 6, kind: output, shape index: {}]
  %s7 = sld [smem:[#allocation0]]
  $region65: #{tpu_custom_call.1} parent=0
    _
  %s9 = ssub.s32 1, %s7
  %s10 = scalar_select 0, %s9, %s7
  $region1: #{tpu_custom_call.1} parent=0
    #allocation2 [shape = 'u8[131072]{0}', space=vmem, size = 0x20000, scoped, tag = 'input window, operand 0']
    #allocation3 [shape = 's32[2]{0}', space=sflag, size = 0x8, scoped, tag = 'scoped memory for tpu_custom_call.1']
    #allocation4 [shape = 's32[2]{0}', space=sflag, size = 0x8, scoped, tag = 'scoped memory for tpu_custom_call.1']
    #allocation5 [shape = 'u8[262144]{0}', space=vmem, size = 0x40000, scoped, tag = 'input window, operand 1']
    #allocation6 [shape = 's32[2]{0}', space=sflag, size = 0x8, scoped, tag = 'scoped memory for tpu_custom_call.1']
    #allocation7 [shape = 'u8[8192]{0}', space=vmem, size = 0x2000, scoped, tag = 'output window, operand 0']
    %11 = vsyncpa [#allocation3], 0
    %s12 = scalar_lea.sflag [#allocation3], 1
    %13 = vsyncpa %s12, 0
    %14 = vsyncpa [#allocation6], 0
    %s15 = scalar_lea.sflag [#allocation6], 1
    %16 = vsyncpa %s15, 0
    %17 = vsyncpa [#allocation4], 0
    %s18 = scalar_lea.sflag [#allocation4], 1
    %19 = vsyncpa %s18, 0
    loop: start=0, step=1, limit=4
    $region2: #{tpu_custom_call.1} parent=1 // loop_pre_header
      _
    $region3: #{tpu_custom_call.1} parent=1 // loop_header
      %s21 = sphi 0, %s25
      %p22 = scmp.ge.s32.totalorder %s21, 4
      %s31 = sphi 0, %s33
      %s34 = sphi 0, %s31
      %s35 = sphi 0, %s34
      %s51 = sphi 0, %s35
      %s57 = sphi 0, %s59
      %s60 = sphi 0, %s57
      %s61 = sphi 0, %s60
      %s77 = sphi 0, %s61
      %s81 = sphi 0, %s81
      %s83 = sphi 0, %s81
      %s84 = sphi 0, %s83
      %s98 = sphi 0, %s84
      %s102 = sphi 0, %s102
      %s104 = sphi 0, %s102
      %s105 = sphi 0, %s104
      %s119 = sphi 0, %s105
      %s123 = sphi 0, %s123
      %s125 = sphi 0, %s123
      %s126 = sphi 0, %s125
      %s140 = sphi 0, %s126
      %s144 = sphi 0, %s144
      %s146 = sphi 0, %s144
      %s147 = sphi 0, %s146
      %s161 = sphi 0, %s147
      %s167 = sphi 0, %s169
      %s170 = sphi 0, %s167
      %s171 = sphi 0, %s170
      %s187 = sphi 0, %s171
    $region4: #{tpu_custom_call.1} parent=1 // loop_header_branch
      %24 = sbr.rel (%p22) target = $region8
    $region5: #{tpu_custom_call.1} parent=1 // loop_body
      %s26 = ssub.s32 %s21, 1
      %s27 = ssub.s32 %s21, 2
      %s28 = sadd.s32 %s21, 1
      %s29 = ssub.s32 %s21, %s28
      %p30 = scmp.eq.s32.totalorder %s29, 0
      %s32 = sadd.s32 %s31, 1
      %s33 = scalar_select %p30, %s31, %s32
      %p36 = pneg %p30
      %p37 = scmp.eq.s32.totalorder %s21, 1
      %p38 = por %p36, %p37
      %p39 = scmp.ne.s32.totalorder %s31, %s34
      %p40 = scmp.eq.s32.totalorder %s21, 0
      %p41 = por %p39, %p40
      %p42 = scmp.ne.s32.totalorder %s31, %s34
      %p43 = scmp.eq.s32.totalorder %s26, 1
      %p44 = por %p42, %p43
      %p45 = scmp.ne.s32.totalorder %s34, %s35
      %p46 = scmp.eq.s32.totalorder %s26, 0
      %p47 = por %p45, %p46
      %p48 = scmp.ne.s32.totalorder %s34, %s35
      %p49 = scmp.eq.s32.totalorder %s27, 1
      %p50 = por %p48, %p49
      %p52 = scmp.ne.s32.totalorder %s35, %s51
      %p53 = scmp.eq.s32.totalorder %s27, 0
      %p54 = por %p52, %p53
      %s55 = ssub.s32 %s21, %s28
      %p56 = scmp.eq.s32.totalorder %s55, 0
      %s58 = sadd.s32 %s57, 1
      %s59 = scalar_select %p56, %s57, %s58
      %p62 = pneg %p56
      %p63 = scmp.eq.s32.totalorder %s21, 1
      %p64 = por %p62, %p63
      %p65 = scmp.ne.s32.totalorder %s57, %s60
      %p66 = scmp.eq.s32.totalorder %s21, 0
      %p67 = por %p65, %p66
      %p68 = scmp.ne.s32.totalorder %s57, %s60
      %p69 = scmp.eq.s32.totalorder %s26, 1
      %p70 = por %p68, %p69
      %p71 = scmp.ne.s32.totalorder %s60, %s61
      %p72 = scmp.eq.s32.totalorder %s26, 0
      %p73 = por %p71, %p72
      %p74 = scmp.ne.s32.totalorder %s60, %s61
      %p75 = scmp.eq.s32.totalorder %s27, 1
      %p76 = por %p74, %p75
      %p78 = scmp.ne.s32.totalorder %s61, %s77
      %p79 = scmp.eq.s32.totalorder %s27, 0
      %p80 = por %p78, %p79
      %s82 = sadd.s32 %s81, 1
      %p85 = scmp.eq.s32.totalorder %s21, 1
      %p86 = scmp.ne.s32.totalorder %s81, %s83
      %p87 = scmp.eq.s32.totalorder %s21, 0
      %p88 = por %p86, %p87
      %p89 = scmp.ne.s32.totalorder %s81, %s83
      %p90 = scmp.eq.s32.totalorder %s26, 1
      %p91 = por %p89, %p90
      %p92 = scmp.ne.s32.totalorder %s83, %s84
      %p93 = scmp.eq.s32.totalorder %s26, 0
      %p94 = por %p92, %p93
      %p95 = scmp.ne.s32.totalorder %s83, %s84
      %p96 = scmp.eq.s32.totalorder %s27, 1
      %p97 = por %p95, %p96
      %p99 = scmp.ne.s32.totalorder %s84, %s98
      %p100 = scmp.eq.s32.totalorder %s27, 0
      %p101 = por %p99, %p100
      %s103 = sadd.s32 %s102, 1
      %p106 = scmp.eq.s32.totalorder %s21, 1
      %p107 = scmp.ne.s32.totalorder %s102, %s104
      %p108 = scmp.eq.s32.totalorder %s21, 0
      %p109 = por %p107, %p108
      %p110 = scmp.ne.s32.totalorder %s102, %s104
      %p111 = scmp.eq.s32.totalorder %s26, 1
      %p112 = por %p110, %p111
      %p113 = scmp.ne.s32.totalorder %s104, %s105
      %p114 = scmp.eq.s32.totalorder %s26, 0
      %p115 = por %p113, %p114
      %p116 = scmp.ne.s32.totalorder %s104, %s105
      %p117 = scmp.eq.s32.totalorder %s27, 1
      %p118 = por %p116, %p117
      %p120 = scmp.ne.s32.totalorder %s105, %s119
      %p121 = scmp.eq.s32.totalorder %s27, 0
      %p122 = por %p120, %p121
      %s124 = sadd.s32 %s123, 1
      %p127 = scmp.eq.s32.totalorder %s21, 1
      %p128 = scmp.ne.s32.totalorder %s123, %s125
      %p129 = scmp.eq.s32.totalorder %s21, 0
      %p130 = por %p128, %p129
      %p131 = scmp.ne.s32.totalorder %s123, %s125
      %p132 = scmp.eq.s32.totalorder %s26, 1
      %p133 = por %p131, %p132
      %p134 = scmp.ne.s32.totalorder %s125, %s126
      %p135 = scmp.eq.s32.totalorder %s26, 0
      %p136 = por %p134, %p135
      %p137 = scmp.ne.s32.totalorder %s125, %s126
      %p138 = scmp.eq.s32.totalorder %s27, 1
      %p139 = por %p137, %p138
      %p141 = scmp.ne.s32.totalorder %s126, %s140
      %p142 = scmp.eq.s32.totalorder %s27, 0
      %p143 = por %p141, %p142
      %s145 = sadd.s32 %s144, 1
      %p148 = scmp.eq.s32.totalorder %s21, 1
      %p149 = scmp.ne.s32.totalorder %s144, %s146
      %p150 = scmp.eq.s32.totalorder %s21, 0
      %p151 = por %p149, %p150
      %p152 = scmp.ne.s32.totalorder %s144, %s146
      %p153 = scmp.eq.s32.totalorder %s26, 1
      %p154 = por %p152, %p153
      %p155 = scmp.ne.s32.totalorder %s146, %s147
      %p156 = scmp.eq.s32.totalorder %s26, 0
      %p157 = por %p155, %p156
      %p158 = scmp.ne.s32.totalorder %s146, %s147
      %p159 = scmp.eq.s32.totalorder %s27, 1
      %p160 = por %p158, %p159
      %p162 = scmp.ne.s32.totalorder %s147, %s161
      %p163 = scmp.eq.s32.totalorder %s27, 0
      %p164 = por %p162, %p163
      %s165 = ssub.s32 %s21, %s28
      %p166 = scmp.eq.s32.totalorder %s165, 0
      %s168 = sadd.s32 %s167, 1
      %s169 = scalar_select %p166, %s167, %s168
      %p172 = pneg %p166
      %p173 = scmp.eq.s32.totalorder %s21, 1
      %p174 = por %p172, %p173
      %p175 = scmp.ne.s32.totalorder %s167, %s170
      %p176 = scmp.eq.s32.totalorder %s21, 0
      %p177 = por %p175, %p176
      %p178 = scmp.ne.s32.totalorder %s167, %s170
      %p179 = scmp.eq.s32.totalorder %s26, 1
      %p180 = por %p178, %p179
      %p181 = scmp.ne.s32.totalorder %s170, %s171
      %p182 = scmp.eq.s32.totalorder %s26, 0
      %p183 = por %p181, %p182
      %p184 = scmp.ne.s32.totalorder %s170, %s171
      %p185 = scmp.eq.s32.totalorder %s27, 1
      %p186 = por %p184, %p185
      %p188 = scmp.ne.s32.totalorder %s171, %s187
      %p189 = scmp.eq.s32.totalorder %s27, 0
      %p190 = por %p188, %p189
      %p191 = scmp.le.s32.totalorder 1, %s21
      %p192 = scmp.lt.s32.totalorder %s21, 3
      %p193 = pnand %p191, %p192
      %p194 = pneg %p193
      // Predicated region
      $region9: #{tpu_custom_call.1} parent=5 // pred_check
        _
      $region10: #{tpu_custom_call.1} parent=5 // pred_check_branch
        %196 = sbr.rel (%p193) target = $region12
      $region11: #{tpu_custom_call.1} parent=5 // pred_region
        %s197 = ssub.s32 %s21, 1
        // Predicated region
        $region13: #{tpu_custom_call.1} parent=11 // pred_check
          %p198 = pneg %p94
        $region14: #{tpu_custom_call.1} parent=11 // pred_check_branch
          %200 = sbr.rel (%p198) target = $region16
        $region15: #{tpu_custom_call.1} parent=11 // pred_region
          _
        $region16: #{tpu_custom_call.1} parent=11 // pred_fallthru
          _
        // Predicated region
        $region17: #{tpu_custom_call.1} parent=11 // pred_check
          %p201 = pneg %p115
        $region18: #{tpu_custom_call.1} parent=11 // pred_check_branch
          %203 = sbr.rel (%p201) target = $region20
        $region19: #{tpu_custom_call.1} parent=11 // pred_region
          _
        $region20: #{tpu_custom_call.1} parent=11 // pred_fallthru
          _
        // Predicated region
        $region21: #{tpu_custom_call.1} parent=11 // pred_check
          %p204 = pneg %p136
        $region22: #{tpu_custom_call.1} parent=11 // pred_check_branch
          %206 = sbr.rel (%p204) target = $region24
        $region23: #{tpu_custom_call.1} parent=11 // pred_region
          _
        $region24: #{tpu_custom_call.1} parent=11 // pred_fallthru
          _
        // Predicated region
        $region25: #{tpu_custom_call.1} parent=11 // pred_check
          %p207 = pneg %p157
        $region26: #{tpu_custom_call.1} parent=11 // pred_check_branch
          %209 = sbr.rel (%p207) target = $region28
        $region27: #{tpu_custom_call.1} parent=11 // pred_region
          _
        $region28: #{tpu_custom_call.1} parent=11 // pred_fallthru
          _
      $region12: #{tpu_custom_call.1} parent=5 // pred_fallthru
        _
      %p210 = scmp.lt.s32.totalorder %s21, 2
      // Predicated region
      $region29: #{tpu_custom_call.1} parent=5 // pred_check
        %p211 = pneg %p210
      $region30: #{tpu_custom_call.1} parent=5 // pred_check_branch
        %213 = sbr.rel (%p211) target = $region32
      $region31: #{tpu_custom_call.1} parent=5 // pred_region
        // Predicated region
        $region33: #{tpu_custom_call.1} parent=31 // pred_check
          %p214 = pneg %p41
        $region34: #{tpu_custom_call.1} parent=31 // pred_check_branch
          %216 = sbr.rel (%p214) target = $region36
        $region35: #{tpu_custom_call.1} parent=31 // pred_region
          %s217 = sand.u32 %s31, 1
          %s218 = scalar_lea.sflag [#allocation3], %s217
          %s219 = sand.u32 %s31, 1
          %s220 = smul.addr %s219, 128
          %s221 = scalar_lea.vmem [#allocation2], %s220
          %s222 = smul.u32 8, %s21
          %s224 = ssub.s32 2048, 2048
          %225 = vsyncadd %s218, %s224
          %s226 = smul.addr %s222, 2
          %s227 = smul.addr %s226, 128
          %s228 = scalar_lea.hbm %s0, %s227
          %s229 = sshll.u32 %s221, 4
          %s230 = int_to_ptr.vmem [resolvable:$true] %s229
          %235 = dma.hbm_to_vmem [thread:$0]  %s228, 2048, %s230, %s218, 128, 128, 8
        $region36: #{tpu_custom_call.1} parent=31 // pred_fallthru
          _
        // Predicated region
        $region37: #{tpu_custom_call.1} parent=31 // pred_check
          %p236 = pneg %p67
        $region38: #{tpu_custom_call.1} parent=31 // pred_check_branch
          %238 = sbr.rel (%p236) target = $region40
        $region39: #{tpu_custom_call.1} parent=31 // pred_region
          %s239 = sand.u32 %s57, 1
          %s240 = scalar_lea.sflag [#allocation6], %s239
          %s241 = sand.u32 %s57, 1
          %s242 = smul.addr %s241, 256
          %s243 = scalar_lea.vmem [#allocation5], %s242
          %s244 = smul.u32 8, %s21
          %s246 = ssub.s32 4096, 4096
          %247 = vsyncadd %s240, %s246
          %s248 = smul.addr %s244, 4
          %s249 = smul.addr %s248, 128
          %s250 = scalar_lea.hbm %s1, %s249
          %s251 = sshll.u32 %s243, 4
          %s252 = int_to_ptr.vmem [resolvable:$true] %s251
          %257 = dma.hbm_to_vmem [thread:$0]  %s250, 4096, %s252, %s240, 256, 256, 16
        $region40: #{tpu_custom_call.1} parent=31 // pred_fallthru
          _
      $region32: #{tpu_custom_call.1} parent=5 // pred_fallthru
        _
      %p258 = scmp.le.s32.totalorder 1, %s21
      %p259 = scmp.lt.s32.totalorder %s21, 3
      %p260 = pnand %p258, %p259
      %p261 = pneg %p260
      // Predicated region
      $region41: #{tpu_custom_call.1} parent=5 // pred_check
        _
      $region42: #{tpu_custom_call.1} parent=5 // pred_check_branch
        %263 = sbr.rel (%p260) target = $region44
      $region43: #{tpu_custom_call.1} parent=5 // pred_region
        %s264 = ssub.s32 %s21, 1
        %s265 = sand.u32 %s34, 1
        %s266 = scalar_lea.sflag [#allocation3], %s265
        %s267 = sand.u32 %s34, 1
        %s268 = smul.addr %s267, 128
        %s269 = scalar_lea.vmem [#allocation2], %s268
        // Predicated region
        $region45: #{tpu_custom_call.1} parent=43 // pred_check
          %p270 = pneg %p47
        $region46: #{tpu_custom_call.1} parent=43 // pred_check_branch
          %272 = sbr.rel (%p270) target = $region48
        $region47: #{tpu_custom_call.1} parent=43 // pred_region
          %273 = dma.done %s266, 2048
        $region48: #{tpu_custom_call.1} parent=43 // pred_fallthru
          _
        %s274 = sand.u32 %s60, 1
        %s275 = scalar_lea.sflag [#allocation6], %s274
        %s276 = sand.u32 %s60, 1
        %s277 = smul.addr %s276, 256
        %s278 = scalar_lea.vmem [#allocation5], %s277
        // Predicated region
        $region49: #{tpu_custom_call.1} parent=43 // pred_check
          %p279 = pneg %p73
        $region50: #{tpu_custom_call.1} parent=43 // pred_check_branch
          %281 = sbr.rel (%p279) target = $region52
        $region51: #{tpu_custom_call.1} parent=43 // pred_region
          %282 = dma.done %s275, 4096
        $region52: #{tpu_custom_call.1} parent=43 // pred_fallthru
          _
        %s283 = sand.u32 %s34, 1
        %s284 = scalar_lea.sflag [#allocation3], %s283
        %s285 = sand.u32 %s34, 1
        %s286 = smul.addr %s285, 128
        %s287 = scalar_lea.vmem [#allocation2], %s286
        %p288 = pneg %p47
        %p289 = pneg %p44
        %s290 = sand.u32 %s60, 1
        %s291 = scalar_lea.sflag [#allocation6], %s290
        %s292 = sand.u32 %s60, 1
        %s293 = smul.addr %s292, 256
        %s294 = scalar_lea.vmem [#allocation5], %s293
        %p295 = pneg %p73
        %p296 = pneg %p70
        %p297 = pneg %p94
        %p298 = pneg %p91
        %p299 = pneg %p115
        %p300 = pneg %p112
        %p301 = pneg %p136
        %p302 = pneg %p133
        %p303 = pneg %p157
        %p304 = pneg %p154
        %p305 = pneg %p183
        %p306 = pneg %p180
        %s307 = sand.u32 %s170, 1
        %s308 = scalar_lea.sflag [#allocation4], %s307
        %s309 = sand.u32 %s170, 1
        %s310 = smul.addr %s309, 8
        %s311 = scalar_lea.vmem [#allocation7], %s310
        %s312 = smul.u32 8, %s26
        %s313 = smul.u32 8, %s26
        %v314 = vld [vmem:[%s269] sm:$0xff]
        %v315 = vld [vmem:[%s269 + $0x8] sm:$0xff]
        %v316 = vld [vmem:[%s269 + $0x10] sm:$0xff]
        %v317 = vld [vmem:[%s269 + $0x18] sm:$0xff]
        %v318 = vld [vmem:[%s269 + $0x20] sm:$0xff]
        %v319 = vld [vmem:[%s269 + $0x28] sm:$0xff]
        %v320 = vld [vmem:[%s269 + $0x30] sm:$0xff]
        %v321 = vld [vmem:[%s269 + $0x38] sm:$0xff]
        %v322 = vld [vmem:[%s269 + $0x40] sm:$0xff]
        %v323 = vld [vmem:[%s269 + $0x48] sm:$0xff]
        %v324 = vld [vmem:[%s269 + $0x50] sm:$0xff]
        %v325 = vld [vmem:[%s269 + $0x58] sm:$0xff]
        %v326 = vld [vmem:[%s269 + $0x60] sm:$0xff]
        %v327 = vld [vmem:[%s269 + $0x68] sm:$0xff]
        %v328 = vld [vmem:[%s269 + $0x70] sm:$0xff]
        %v329 = vld [vmem:[%s269 + $0x78] sm:$0xff]
        %vm330 = vcmask 523264
        %v331 = vsel %vm330, %v314, 0.0
        %332 = vadd.xlane.f32.xlu0 %v331
        %v333 = vpop.xlane.xlu0 %332
        %v334 = vsel %vm330, %v315, 0.0
        %335 = vadd.xlane.f32.xlu0 %v334
        %v336 = vpop.xlane.xlu0 %335
        %v337 = vsel %vm330, %v316, 0.0
        %338 = vadd.xlane.f32.xlu0 %v337
        %v339 = vpop.xlane.xlu0 %338
        %v340 = vsel %vm330, %v317, 0.0
        %341 = vadd.xlane.f32.xlu0 %v340
        %v342 = vpop.xlane.xlu0 %341
        %v343 = vsel %vm330, %v318, 0.0
        %344 = vadd.xlane.f32.xlu0 %v343
        %v345 = vpop.xlane.xlu0 %344
        %v346 = vsel %vm330, %v319, 0.0
        %347 = vadd.xlane.f32.xlu0 %v346
        %v348 = vpop.xlane.xlu0 %347
        %v349 = vsel %vm330, %v320, 0.0
        %350 = vadd.xlane.f32.xlu0 %v349
        %v351 = vpop.xlane.xlu0 %350
        %v352 = vsel %vm330, %v321, 0.0
        %353 = vadd.xlane.f32.xlu0 %v352
        %v354 = vpop.xlane.xlu0 %353
        %v355 = vsel %vm330, %v322, 0.0
        %356 = vadd.xlane.f32.xlu0 %v355
        %v357 = vpop.xlane.xlu0 %356
        %v358 = vsel %vm330, %v323, 0.0
        %359 = vadd.xlane.f32.xlu0 %v358
        %v360 = vpop.xlane.xlu0 %359
        %v361 = vsel %vm330, %v324, 0.0
        %362 = vadd.xlane.f32.xlu0 %v361
        %v363 = vpop.xlane.xlu0 %362
        %v364 = vsel %vm330, %v325, 0.0
        %365 = vadd.xlane.f32.xlu0 %v364
        %v366 = vpop.xlane.xlu0 %365
        %v367 = vsel %vm330, %v326, 0.0
        %368 = vadd.xlane.f32.xlu0 %v367
        %v369 = vpop.xlane.xlu0 %368
        %v370 = vsel %vm330, %v327, 0.0
        %371 = vadd.xlane.f32.xlu0 %v370
        %v372 = vpop.xlane.xlu0 %371
        %v373 = vsel %vm330, %v328, 0.0
        %374 = vadd.xlane.f32.xlu0 %v373
        %v375 = vpop.xlane.xlu0 %374
        %v376 = vsel %vm330, %v329, 0.0
        %377 = vadd.xlane.f32.xlu0 %v376
        %v378 = vpop.xlane.xlu0 %377
        %v379 = vrcp.pop 64.0
        %v380 = vmul.f32 %v333, %v379
        %v381 = vmul.f32 %v336, %v379
        %v382 = vmul.f32 %v339, %v379
        %v383 = vmul.f32 %v342, %v379
        %v384 = vmul.f32 %v345, %v379
        %v385 = vmul.f32 %v348, %v379
        %v386 = vmul.f32 %v351, %v379
        %v387 = vmul.f32 %v354, %v379
        %v388 = vmul.f32 %v357, %v379
        %v389 = vmul.f32 %v360, %v379
        %v390 = vmul.f32 %v363, %v379
        %v391 = vmul.f32 %v366, %v379
        %v392 = vmul.f32 %v369, %v379
        %v393 = vmul.f32 %v372, %v379
        %v394 = vmul.f32 %v375, %v379
        %v395 = vmul.f32 %v378, %v379
        %v396 = vld [vmem:[%s278] sm:$0xff]
        %v397 = vld [vmem:[%s278 + $0x8] sm:$0xff]
        %v398 = vld [vmem:[%s278 + $0x10] sm:$0xff]
        %v399 = vld [vmem:[%s278 + $0x18] sm:$0xff]
        %v400 = vld [vmem:[%s278 + $0x20] sm:$0xff]
        %v401 = vld [vmem:[%s278 + $0x28] sm:$0xff]
        %v402 = vld [vmem:[%s278 + $0x30] sm:$0xff]
        %v403 = vld [vmem:[%s278 + $0x38] sm:$0xff]
        %v404 = vld [vmem:[%s278 + $0x40] sm:$0xff]
        %v405 = vld [vmem:[%s278 + $0x48] sm:$0xff]
        %v406 = vld [vmem:[%s278 + $0x50] sm:$0xff]
        %v407 = vld [vmem:[%s278 + $0x58] sm:$0xff]
        %v408 = vld [vmem:[%s278 + $0x60] sm:$0xff]
        %v409 = vld [vmem:[%s278 + $0x68] sm:$0xff]
        %v410 = vld [vmem:[%s278 + $0x70] sm:$0xff]
        %v411 = vld [vmem:[%s278 + $0x78] sm:$0xff]
        %v412 = vld [vmem:[%s278 + $0x80] sm:$0xff]
        %v413 = vld [vmem:[%s278 + $0x88] sm:$0xff]
        %v414 = vld [vmem:[%s278 + $0x90] sm:$0xff]
        %v415 = vld [vmem:[%s278 + $0x98] sm:$0xff]
        %v416 = vld [vmem:[%s278 + $0xa0] sm:$0xff]
        %v417 = vld [vmem:[%s278 + $0xa8] sm:$0xff]
        %v418 = vld [vmem:[%s278 + $0xb0] sm:$0xff]
        %v419 = vld [vmem:[%s278 + $0xb8] sm:$0xff]
        %v420 = vld [vmem:[%s278 + $0xc0] sm:$0xff]
        %v421 = vld [vmem:[%s278 + $0xc8] sm:$0xff]
        %v422 = vld [vmem:[%s278 + $0xd0] sm:$0xff]
        %v423 = vld [vmem:[%s278 + $0xd8] sm:$0xff]
        %v424 = vld [vmem:[%s278 + $0xe0] sm:$0xff]
        %v425 = vld [vmem:[%s278 + $0xe8] sm:$0xff]
        %v426 = vld [vmem:[%s278 + $0xf0] sm:$0xff]
        %v427 = vld [vmem:[%s278 + $0xf8] sm:$0xff]
        %v428 = vmax.f32 %v396, %v397
        %429 = vmax.xlane.f32.xlu0 %v428
        %v430 = vpop.xlane.xlu0 %429
        %v431 = vmax.f32 %v398, %v399
        %432 = vmax.xlane.f32.xlu0 %v431
        %v433 = vpop.xlane.xlu0 %432
        %v434 = vmax.f32 %v400, %v401
        %435 = vmax.xlane.f32.xlu0 %v434
        %v436 = vpop.xlane.xlu0 %435
        %v437 = vmax.f32 %v402, %v403
        %438 = vmax.xlane.f32.xlu0 %v437
        %v439 = vpop.xlane.xlu0 %438
        %v440 = vmax.f32 %v404, %v405
        %441 = vmax.xlane.f32.xlu0 %v440
        %v442 = vpop.xlane.xlu0 %441
        %v443 = vmax.f32 %v406, %v407
        %444 = vmax.xlane.f32.xlu0 %v443
        %v445 = vpop.xlane.xlu0 %444
        %v446 = vmax.f32 %v408, %v409
        %447 = vmax.xlane.f32.xlu0 %v446
        %v448 = vpop.xlane.xlu0 %447
        %v449 = vmax.f32 %v410, %v411
        %450 = vmax.xlane.f32.xlu0 %v449
        %v451 = vpop.xlane.xlu0 %450
        %v452 = vmax.f32 %v412, %v413
        %453 = vmax.xlane.f32.xlu0 %v452
        %v454 = vpop.xlane.xlu0 %453
        %v455 = vmax.f32 %v414, %v415
        %456 = vmax.xlane.f32.xlu0 %v455
        %v457 = vpop.xlane.xlu0 %456
        %v458 = vmax.f32 %v416, %v417
        %459 = vmax.xlane.f32.xlu0 %v458
        %v460 = vpop.xlane.xlu0 %459
        %v461 = vmax.f32 %v418, %v419
        %462 = vmax.xlane.f32.xlu0 %v461
        %v463 = vpop.xlane.xlu0 %462
        %v464 = vmax.f32 %v420, %v421
        %465 = vmax.xlane.f32.xlu0 %v464
        %v466 = vpop.xlane.xlu0 %465
        %v467 = vmax.f32 %v422, %v423
        %468 = vmax.xlane.f32.xlu0 %v467
        %v469 = vpop.xlane.xlu0 %468
        %v470 = vmax.f32 %v424, %v425
        %471 = vmax.xlane.f32.xlu0 %v470
        %v472 = vpop.xlane.xlu0 %471
        %v473 = vmax.f32 %v426, %v427
        %474 = vmax.xlane.f32.xlu0 %v473
        %v475 = vpop.xlane.xlu0 %474
        %v492 = vlaneseq
        %v493 = vand.u32 %v492, 127
        %v494 = vlaneseq
        %v495 = vshrl.u32 %v494, 7
        %v496 = vsub.s32 %v493, %v495
        %v497 = vrot.slane %v380, %v496
        %v498 = vadd.s32 %v493, 4294967288
        %v499 = vlaneseq
        %v500 = vshrl.u32 %v499, 7
        %v501 = vsub.s32 %v498, %v500
        %v502 = vrot.slane %v381, %v501
        %vm503 = vcmask 130112
        %v504 = vsel %vm503, %v502, %v497
        %v505 = vlaneseq
        %v506 = vshrl.u32 %v505, 7
        %v507 = vsub.s32 %v493, %v506
        %v508 = vrot.slane %v382, %v507
        %v509 = vlaneseq
        %v510 = vshrl.u32 %v509, 7
        %v511 = vsub.s32 %v498, %v510
        %v512 = vrot.slane %v383, %v511
        %v513 = vsel %vm503, %v512, %v508
        %v514 = vlaneseq
        %v515 = vshrl.u32 %v514, 7
        %v516 = vsub.s32 %v493, %v515
        %v517 = vrot.slane %v384, %v516
        %v518 = vlaneseq
        %v519 = vshrl.u32 %v518, 7
        %v520 = vsub.s32 %v498, %v519
        %v521 = vrot.slane %v385, %v520
        %v522 = vsel %vm503, %v521, %v517
        %v523 = vlaneseq
        %v524 = vshrl.u32 %v523, 7
        %v525 = vsub.s32 %v493, %v524
        %v526 = vrot.slane %v386, %v525
        %v527 = vlaneseq
        %v528 = vshrl.u32 %v527, 7
        %v529 = vsub.s32 %v498, %v528
        %v530 = vrot.slane %v387, %v529
        %v531 = vsel %vm503, %v530, %v526
        %v532 = vlaneseq
        %v533 = vshrl.u32 %v532, 7
        %v534 = vsub.s32 %v493, %v533
        %v535 = vrot.slane %v388, %v534
        %v536 = vlaneseq
        %v537 = vshrl.u32 %v536, 7
        %v538 = vsub.s32 %v498, %v537
        %v539 = vrot.slane %v389, %v538
        %v540 = vsel %vm503, %v539, %v535
        %v541 = vlaneseq
        %v542 = vshrl.u32 %v541, 7
        %v543 = vsub.s32 %v493, %v542
        %v544 = vrot.slane %v390, %v543
        %v545 = vlaneseq
        %v546 = vshrl.u32 %v545, 7
        %v547 = vsub.s32 %v498, %v546
        %v548 = vrot.slane %v391, %v547
        %v549 = vsel %vm503, %v548, %v544
        %v550 = vlaneseq
        %v551 = vshrl.u32 %v550, 7
        %v552 = vsub.s32 %v493, %v551
        %v553 = vrot.slane %v392, %v552
        %v554 = vlaneseq
        %v555 = vshrl.u32 %v554, 7
        %v556 = vsub.s32 %v498, %v555
        %v557 = vrot.slane %v393, %v556
        %v558 = vsel %vm503, %v557, %v553
        %v559 = vlaneseq
        %v560 = vshrl.u32 %v559, 7
        %v561 = vsub.s32 %v493, %v560
        %v562 = vrot.slane %v394, %v561
        %v563 = vlaneseq
        %v564 = vshrl.u32 %v563, 7
        %v565 = vsub.s32 %v498, %v564
        %v566 = vrot.slane %v395, %v565
        %v567 = vsel %vm503, %v566, %v562
        %vm568 = vcmask 1041409
        %v569 = vsel %vm568, %v513, %v504
        %vm570 = vcmask 1042434
        %v571 = vsel %vm570, %v522, %v569
        %vm572 = vcmask 1043459
        %v573 = vsel %vm572, %v531, %v571
        %vm574 = vcmask 1044484
        %v575 = vsel %vm574, %v540, %v573
        %vm576 = vcmask 1045509
        %v577 = vsel %vm576, %v549, %v575
        %vm578 = vcmask 1046534
        %v579 = vsel %vm578, %v558, %v577
        %vm580 = vcmask 1047559
        %v581 = vsel %vm580, %v567, %v579
        %v598 = vlaneseq
        %v599 = vshrl.u32 %v598, 7
        %v600 = vsub.s32 %v493, %v599
        %v601 = vrot.slane %v430, %v600
        %v602 = vlaneseq
        %v603 = vshrl.u32 %v602, 7
        %v604 = vsub.s32 %v498, %v603
        %v605 = vrot.slane %v433, %v604
        %v606 = vsel %vm503, %v605, %v601
        %v607 = vlaneseq
        %v608 = vshrl.u32 %v607, 7
        %v609 = vsub.s32 %v493, %v608
        %v610 = vrot.slane %v436, %v609
        %v611 = vlaneseq
        %v612 = vshrl.u32 %v611, 7
        %v613 = vsub.s32 %v498, %v612
        %v614 = vrot.slane %v439, %v613
        %v615 = vsel %vm503, %v614, %v610
        %v616 = vlaneseq
        %v617 = vshrl.u32 %v616, 7
        %v618 = vsub.s32 %v493, %v617
        %v619 = vrot.slane %v442, %v618
        %v620 = vlaneseq
        %v621 = vshrl.u32 %v620, 7
        %v622 = vsub.s32 %v498, %v621
        %v623 = vrot.slane %v445, %v622
        %v624 = vsel %vm503, %v623, %v619
        %v625 = vlaneseq
        %v626 = vshrl.u32 %v625, 7
        %v627 = vsub.s32 %v493, %v626
        %v628 = vrot.slane %v448, %v627
        %v629 = vlaneseq
        %v630 = vshrl.u32 %v629, 7
        %v631 = vsub.s32 %v498, %v630
        %v632 = vrot.slane %v451, %v631
        %v633 = vsel %vm503, %v632, %v628
        %v634 = vlaneseq
        %v635 = vshrl.u32 %v634, 7
        %v636 = vsub.s32 %v493, %v635
        %v637 = vrot.slane %v454, %v636
        %v638 = vlaneseq
        %v639 = vshrl.u32 %v638, 7
        %v640 = vsub.s32 %v498, %v639
        %v641 = vrot.slane %v457, %v640
        %v642 = vsel %vm503, %v641, %v637
        %v643 = vlaneseq
        %v644 = vshrl.u32 %v643, 7
        %v645 = vsub.s32 %v493, %v644
        %v646 = vrot.slane %v460, %v645
        %v647 = vlaneseq
        %v648 = vshrl.u32 %v647, 7
        %v649 = vsub.s32 %v498, %v648
        %v650 = vrot.slane %v463, %v649
        %v651 = vsel %vm503, %v650, %v646
        %v652 = vlaneseq
        %v653 = vshrl.u32 %v652, 7
        %v654 = vsub.s32 %v493, %v653
        %v655 = vrot.slane %v466, %v654
        %v656 = vlaneseq
        %v657 = vshrl.u32 %v656, 7
        %v658 = vsub.s32 %v498, %v657
        %v659 = vrot.slane %v469, %v658
        %v660 = vsel %vm503, %v659, %v655
        %v661 = vlaneseq
        %v662 = vshrl.u32 %v661, 7
        %v663 = vsub.s32 %v493, %v662
        %v664 = vrot.slane %v472, %v663
        %v665 = vlaneseq
        %v666 = vshrl.u32 %v665, 7
        %v667 = vsub.s32 %v498, %v666
        %v668 = vrot.slane %v475, %v667
        %v669 = vsel %vm503, %v668, %v664
        %v670 = vsel %vm568, %v615, %v606
        %v671 = vsel %vm570, %v624, %v670
        %v672 = vsel %vm572, %v633, %v671
        %v673 = vsel %vm574, %v642, %v672
        %v674 = vsel %vm576, %v651, %v673
        %v675 = vsel %vm578, %v660, %v674
        %v676 = vsel %vm580, %v669, %v675
        %v677 = vld [vmem:[%s2] sm:$0xf]
        %v678 = vld [vmem:[%s3] sm:$0x1]
        %v680 = vlaneseq
        %v681 = vshrl.u32 %v680, 7
        %v682 = vsub.s32 0, %v681
        %v683 = vrot.slane %v678, %v682
        %vm685 = vcmask 130048
        %v686 = vsel %vm685, %v581, 0
        %v688 = vsel %vm685, %v676, 0
        %v691 = vsel %vm685, %v677, 0
        %693 = vmatprep.subr.mxu0 0.0
        %694 = vmatpush1.xpose.msra.mxu0 %v691
        %695 = vmatprep.subr.mxu0 0.0
        %696 = vmatpush1.xpose.msra.mxu0 0.0
        %697 = vmatprep.subr.mxu0 0.0
        %698 = vmatpush1.xpose.msra.mxu0 0.0
        %699 = vmatprep.subr.mxu0 0.0
        %700 = vmatpush1.xpose.msra.mxu0 0.0
        %701 = vmatprep.subr.mxu0 0.0
        %702 = vmatpush1.xpose.msra.mxu0 0.0
        %703 = vmatprep.subr.mxu0 0.0
        %704 = vmatpush1.xpose.msra.mxu0 0.0
        %705 = vmatprep.subr.mxu0 0.0
        %706 = vmatpush1.xpose.msra.mxu0 0.0
        %707 = vmatprep.subr.mxu0 0.0
        %708 = vmatpush1.xpose.msra.mxu0 0.0
        %709 = vmatprep.subr.mxu0 0.0
        %710 = vmatpush1.xpose.msra.mxu0 0.0
        %711 = vmatprep.subr.mxu0 0.0
        %712 = vmatpush1.xpose.msra.mxu0 0.0
        %713 = vmatprep.subr.mxu0 0.0
        %714 = vmatpush1.xpose.msra.mxu0 0.0
        %715 = vmatprep.subr.mxu0 0.0
        %716 = vmatpush1.xpose.msra.mxu0 0.0
        %717 = vmatprep.subr.mxu0 0.0
        %718 = vmatpush1.xpose.msra.mxu0 0.0
        %719 = vmatprep.subr.mxu0 0.0
        %720 = vmatpush1.xpose.msra.mxu0 0.0
        %721 = vmatprep.subr.mxu0 0.0
        %722 = vmatpush1.xpose.msra.mxu0 0.0
        %723 = vmatprep.subr.mxu0 0.0
        %724 = vmatpush1.xpose.msra.mxu0 0.0
        %725 = vmatprep.subr.mxu0 0.0
        %726 = vmatpush1.xpose.msra.mxu0 0.0
        %727 = vmatprep.subr.mxu0 0.0
        %728 = vmatpush1.xpose.msra.mxu0 0.0
        %729 = vmatprep.subr.mxu0 0.0
        %730 = vmatpush1.xpose.msra.mxu0 0.0
        %731 = vmatprep.subr.mxu0 0.0
        %732 = vmatpush1.xpose.msra.mxu0 0.0
        %733 = vmatprep.subr.mxu0 0.0
        %734 = vmatpush1.xpose.msra.mxu0 0.0
        %735 = vmatprep.subr.mxu0 0.0
        %736 = vmatpush1.xpose.msra.mxu0 0.0
        %737 = vmatprep.subr.mxu0 0.0
        %738 = vmatpush1.xpose.msra.mxu0 0.0
        %739 = vmatprep.subr.mxu0 0.0
        %740 = vmatpush1.xpose.msra.mxu0 0.0
        %741 = vmatprep.subr.mxu0 0.0
        %742 = vmatpush1.xpose.msra.mxu0 0.0
        %743 = vmatprep.subr.mxu0 0.0
        %744 = vmatpush1.xpose.msra.mxu0 0.0
        %745 = vmatprep.subr.mxu0 0.0
        %746 = vmatpush1.xpose.msra.mxu0 0.0
        %747 = vmatprep.subr.mxu0 0.0
        %748 = vmatpush1.xpose.msra.mxu0 0.0
        %749 = vmatprep.subr.mxu0 0.0
        %750 = vmatpush1.xpose.msra.mxu0 0.0
        %751 = vmatprep.subr.mxu0 0.0
        %752 = vmatpush1.xpose.msra.mxu0 0.0
        %753 = vmatprep.subr.mxu0 0.0
        %754 = vmatpush1.xpose.msra.mxu0 0.0
        %755 = vmatprep.subr.mxu0 0.0
        %756 = vmatpush1.xpose.msra.mxu0 0.0
        %757 = vmatprep.mubr.f32.mxu0 0.0
        %758 = vmatmul.mubr.f32.gmra.mrb[0].mxu0 %v686
        %v759 = vpop.f32.mrb[0].mxu0
        %v760 = vadd.f32 %v683, %v759
        %v761 = vpop.f32.mrb[0].mxu0
        %762 = vmatprep.mubr.f32.mxu0 0.0
        %763 = vmatmul.mubr.f32.gmra.mrb[0].mxu0 %v688
        %v764 = vpop.f32.mrb[0].mxu0
        %v765 = vadd.f32 %v683, %v764
        %v766 = vpop.f32.mrb[0].mxu0
        %767 = vdwg.mxu0
        %v768 = vmax.f32 %v760, 0.0
        %v769 = vmax.f32 %v765, 0.0
        %v770 = vld [vmem:[%s4] sm:$0xff]
        %v771 = vld [vmem:[%s4 + $0x8] sm:$0xff]
        %v772 = vld [vmem:[%s5] sm:$0x1]
        %v774 = vlaneseq
        %v775 = vshrl.u32 %v774, 7
        %v776 = vsub.s32 0, %v775
        %v777 = vrot.slane %v772, %v776
        %vm779 = vcmask 31744
        %v781 = vsel %vm779, %v768, 0
        %v784 = vsel %vm779, %v769, 0
        %v787 = vsel %vm779, %v770, 0
        %v790 = vsel %vm779, %v771, 0
        %792 = vmatprep.subr.mxu0 0.0
        %793 = vmatpush1.xpose.msra.mxu0 %v787
        %794 = vmatprep.subr.mxu0 0.0
        %795 = vmatpush1.xpose.msra.mxu0 %v790
        %796 = vmatprep.subr.mxu0 0.0
        %797 = vmatpush1.xpose.msra.mxu0 0.0
        %798 = vmatprep.subr.mxu0 0.0
        %799 = vmatpush1.xpose.msra.mxu0 0.0
        %800 = vmatprep.subr.mxu0 0.0
        %801 = vmatpush1.xpose.msra.mxu0 0.0
        %802 = vmatprep.subr.mxu0 0.0
        %803 = vmatpush1.xpose.msra.mxu0 0.0
        %804 = vmatprep.subr.mxu0 0.0
        %805 = vmatpush1.xpose.msra.mxu0 0.0
        %806 = vmatprep.subr.mxu0 0.0
        %807 = vmatpush1.xpose.msra.mxu0 0.0
        %808 = vmatprep.subr.mxu0 0.0
        %809 = vmatpush1.xpose.msra.mxu0 0.0
        %810 = vmatprep.subr.mxu0 0.0
        %811 = vmatpush1.xpose.msra.mxu0 0.0
        %812 = vmatprep.subr.mxu0 0.0
        %813 = vmatpush1.xpose.msra.mxu0 0.0
        %814 = vmatprep.subr.mxu0 0.0
        %815 = vmatpush1.xpose.msra.mxu0 0.0
        %816 = vmatprep.subr.mxu0 0.0
        %817 = vmatpush1.xpose.msra.mxu0 0.0
        %818 = vmatprep.subr.mxu0 0.0
        %819 = vmatpush1.xpose.msra.mxu0 0.0
        %820 = vmatprep.subr.mxu0 0.0
        %821 = vmatpush1.xpose.msra.mxu0 0.0
        %822 = vmatprep.subr.mxu0 0.0
        %823 = vmatpush1.xpose.msra.mxu0 0.0
        %824 = vmatprep.subr.mxu0 0.0
        %825 = vmatpush1.xpose.msra.mxu0 0.0
        %826 = vmatprep.subr.mxu0 0.0
        %827 = vmatpush1.xpose.msra.mxu0 0.0
        %828 = vmatprep.subr.mxu0 0.0
        %829 = vmatpush1.xpose.msra.mxu0 0.0
        %830 = vmatprep.subr.mxu0 0.0
        %831 = vmatpush1.xpose.msra.mxu0 0.0
        %832 = vmatprep.subr.mxu0 0.0
        %833 = vmatpush1.xpose.msra.mxu0 0.0
        %834 = vmatprep.subr.mxu0 0.0
        %835 = vmatpush1.xpose.msra.mxu0 0.0
        %836 = vmatprep.subr.mxu0 0.0
        %837 = vmatpush1.xpose.msra.mxu0 0.0
        %838 = vmatprep.subr.mxu0 0.0
        %839 = vmatpush1.xpose.msra.mxu0 0.0
        %840 = vmatprep.subr.mxu0 0.0
        %841 = vmatpush1.xpose.msra.mxu0 0.0
        %842 = vmatprep.subr.mxu0 0.0
        %843 = vmatpush1.xpose.msra.mxu0 0.0
        %844 = vmatprep.subr.mxu0 0.0
        %845 = vmatpush1.xpose.msra.mxu0 0.0
        %846 = vmatprep.subr.mxu0 0.0
        %847 = vmatpush1.xpose.msra.mxu0 0.0
        %848 = vmatprep.subr.mxu0 0.0
        %849 = vmatpush1.xpose.msra.mxu0 0.0
        %850 = vmatprep.subr.mxu0 0.0
        %851 = vmatpush1.xpose.msra.mxu0 0.0
        %852 = vmatprep.subr.mxu0 0.0
        %853 = vmatpush1.xpose.msra.mxu0 0.0
        %854 = vmatprep.subr.mxu0 0.0
        %855 = vmatpush1.xpose.msra.mxu0 0.0
        %856 = vmatprep.mubr.f32.mxu0 0.0
        %857 = vmatmul.mubr.f32.gmra.mrb[0].mxu0 %v781
        %v858 = vpop.f32.mrb[0].mxu0
        %v859 = vadd.f32 %v777, %v858
        %v860 = vpop.f32.mrb[0].mxu0
        %861 = vmatprep.mubr.f32.mxu0 0.0
        %862 = vmatmul.mubr.f32.gmra.mrb[0].mxu0 %v784
        %v863 = vpop.f32.mrb[0].mxu0
        %v864 = vadd.f32 %v777, %v863
        %v865 = vpop.f32.mrb[0].mxu0
        %866 = vdwg.mxu0
        %v867 = vxor.u32 %v859, 2147483648
        %v868 = vxor.u32 %v864, 2147483648
        %v869 = vmul.f32 %v867, 1.442695
        %v870 = vpow.pop %v869
        %v871 = vmul.f32 %v868, 1.442695
        %v872 = vpow.pop %v871
        %v873 = vadd.f32 %v870, 1.0
        %v874 = vadd.f32 %v872, 1.0
        %v875 = vrcp.pop %v873
        %v876 = vmul.f32 1.0, %v875
        %v877 = vrcp.pop %v874
        %v878 = vmul.f32 1.0, %v877
        %v879 = vadd.f32 %v876, %v878
        %880 = vst.msk [vmem:[%s311] sm:$0xff] %vm685, %v879
        %s881 = sand.u32 %s170, 1
        %s882 = scalar_lea.sflag [#allocation4], %s881
        %s883 = sand.u32 %s170, 1
        %s884 = smul.addr %s883, 8
        %s885 = scalar_lea.vmem [#allocation7], %s884
        // Predicated region
        $region53: #{tpu_custom_call.1} parent=43 // pred_check
          %p886 = pneg %p180
        $region54: #{tpu_custom_call.1} parent=43 // pred_check_branch
          %888 = sbr.rel (%p886) target = $region56
        $region55: #{tpu_custom_call.1} parent=43 // pred_region
          %s890 = ssub.s32 128, 128
          %891 = vsyncadd %s882, %s890
          %s892 = smul.addr %s26, 128
          %s893 = scalar_lea.hbm %s6, %s892
          %s895 = sshll.u32 %s885, 4
          %s896 = int_to_ptr.vmem [resolvable:$true] %s895
          %898 = dma.vmem_to_hbm [thread:$0]  %s896, 128, %s893, %s882
        $region56: #{tpu_custom_call.1} parent=43 // pred_fallthru
          _
      $region44: #{tpu_custom_call.1} parent=5 // pred_fallthru
        _
      %p899 = scmp.le.s32.totalorder 2, %s21
      // Predicated region
      $region57: #{tpu_custom_call.1} parent=5 // pred_check
        %p900 = pneg %p899
      $region58: #{tpu_custom_call.1} parent=5 // pred_check_branch
        %902 = sbr.rel (%p900) target = $region60
      $region59: #{tpu_custom_call.1} parent=5 // pred_region
        %s903 = ssub.s32 %s21, 2
        // Predicated region
        $region61: #{tpu_custom_call.1} parent=59 // pred_check
          %p904 = pneg %p186
        $region62: #{tpu_custom_call.1} parent=59 // pred_check_branch
          %906 = sbr.rel (%p904) target = $region64
        $region63: #{tpu_custom_call.1} parent=59 // pred_region
          %s907 = sand.u32 %s171, 1
          %s908 = scalar_lea.sflag [#allocation4], %s907
          %s909 = sand.u32 %s171, 1
          %s910 = smul.addr %s909, 8
          %s911 = scalar_lea.vmem [#allocation7], %s910
          %912 = dma.done %s908, 128
        $region64: #{tpu_custom_call.1} parent=59 // pred_fallthru
          _
      $region60: #{tpu_custom_call.1} parent=5 // pred_fallthru
        _
    $region6: #{tpu_custom_call.1} parent=1 // loop_footer
      %s25 = sadd.s32 1, %s21
    $region7: #{tpu_custom_call.1} parent=1 // loop_footer_branch
      %20 = sbr.rel target = $region3
    $region8: #{tpu_custom_call.1} parent=1 // loop_exit
      _
    %913 = vsyncpa [#allocation3], 1
    %s914 = scalar_lea.sflag [#allocation3], 1
    %915 = vsyncpa %s914, 1
    %916 = vsyncpa [#allocation6], 1
    %s917 = scalar_lea.sflag [#allocation6], 1
    %918 = vsyncpa %s917, 1
    %919 = vsyncpa [#allocation4], 1
    %s920 = scalar_lea.sflag [#allocation4], 1
    %921 = vsyncpa %s920, 1

</llo_original>
